<compile_context>
chip_gen: v5e
topology: v5e:2x2
jax: 0.10.0
libtpu: 0.0.40
codegen_flags: <defaults>
</compile_context>

<pallas_src>
import functools

import jax
import jax.numpy as jnp
from jax import lax
from jax.experimental import pallas as pl
from jax.experimental.pallas import tpu as pltpu


def _round_up(x, m):
    return ((x + m - 1) // m) * m


def _focal_kernel(x_ref, t_ref, o_ref, *, alpha, gamma, eps):
    # x_ref: (1, C, n) logits (any float dtype); C on sublanes, pixels on lanes
    # t_ref: (1, 1, n) int32 class labels
    # o_ref: (1, 1, n) float32 per-pixel loss
    x = x_ref[0].astype(jnp.float32)            # (C, n)
    t = t_ref[0]                                # (1, n)
    c, n = x.shape

    # numerically stable softmax pieces over the class (sublane) axis
    m = jnp.max(x, axis=0, keepdims=True)       # (1, n)
    e = jnp.exp(x - m)                          # (C, n)  -- only (C,n) EUP op
    denom = jnp.sum(e, axis=0, keepdims=True)   # (1, n)

    # one-hot select exp(x_t) per pixel via sublane iota compare
    cls = lax.broadcasted_iota(jnp.int32, (c, n), 0)
    e_t = jnp.sum(jnp.where(cls == t, e, 0.0), axis=0, keepdims=True)  # (1, n)

    # p_t = softmax(x)[target] + eps ; everything below is on a single row
    p_t = e_t / denom + eps
    one_m = 1.0 - p_t

    g_int = int(gamma)
    if float(g_int) == float(gamma) and 0 <= g_int <= 8:
        # integer gamma: plain VPU multiplies (no pow -> exp/log round trip,
        # and well-defined for a slightly negative base)
        w = jnp.ones_like(one_m)
        for _ in range(g_int):
            w = w * one_m
    else:
        w = jnp.power(jnp.maximum(one_m, 0.0), gamma)

    o_ref[0] = (-alpha) * w * jnp.log(p_t)


def focal_loss_pallas(x_nchw, target_bhw, alpha, gamma=2.0, reduction="none",
                      eps=1e-6, max_tile=8192):
    """Pallas implementation of FocalLoss.forward.

    x_nchw:     (B, C, H, W) float logits
    target_bhw: (B, H, W)    int class labels in [0, C)
    """
    B, C, H, W = x_nchw.shape
    HW = H * W

    # free reshapes only: keep channel-major memory order, original dtype
    x = x_nchw.reshape(B, C, HW)
    t = target_bhw.reshape(B, 1, HW).astype(jnp.int32)

    # lane tile: multiple of 128, as large as reasonable (<= max_tile)
    tile_n = min(max_tile, _round_up(HW, 128))
    grid = (B, pl.cdiv(HW, tile_n))

    kernel = functools.partial(_focal_kernel, alpha=float(alpha),
                               gamma=float(gamma), eps=float(eps))

    loss = pl.pallas_call(
        kernel,
        out_shape=jax.ShapeDtypeStruct((B, 1, HW), jnp.float32),
        grid_spec=pltpu.PrefetchScalarGridSpec(
            num_scalar_prefetch=0,
            grid=grid,
            in_specs=[
                pl.BlockSpec((1, C, tile_n), lambda b, j: (b, 0, j)),
                pl.BlockSpec((1, 1, tile_n), lambda b, j: (b, 0, j)),
            ],
            out_specs=pl.BlockSpec((1, 1, tile_n), lambda b, j: (b, 0, j)),
        ),
        compiler_params=pltpu.CompilerParams(
            dimension_semantics=("parallel", "parallel")),
    )(x, t)

    loss = loss.reshape(B, H, W)

    if reduction == "none":
        return loss
    elif reduction == "mean":
        return jnp.mean(loss)
    elif reduction == "sum":
        return jnp.sum(loss)
    else:
        raise NotImplementedError(f"Invalid reduction mode: {reduction}")


def _focal_loss_ref(x_nchw, target_bhw, alpha, gamma=2.0, eps=1e-6):
    # pure-JAX reference matching the PyTorch semantics (reduction='none')
    soft = jax.nn.softmax(x_nchw.astype(jnp.float32), axis=1) + eps
    onehot = jax.nn.one_hot(target_bhw, x_nchw.shape[1], dtype=jnp.float32,
                            axis=1)
    weight = jnp.power(1.0 - soft, gamma)
    focal = -alpha * weight * jnp.log(soft)
    return jnp.sum(onehot * focal, axis=1)


if __name__ == "__main__":
    B, C, H, W = 2, 4, 16, 16
    alpha, gamma, reduction = 0.5, 2.0, "none"

    key = jax.random.PRNGKey(0)
    kx, kt = jax.random.split(key)
    x = jax.random.normal(kx, (B, C, H, W), dtype=jnp.float32)
    target = jax.random.randint(kt, (B, H, W), 0, C, dtype=jnp.int32)

    out = focal_loss_pallas(x, target, alpha, gamma, reduction)
    out = jax.block_until_ready(out)

    ref = _focal_loss_ref(x, target, alpha, gamma, eps=1e-6)
    assert out.shape == (B, H, W)
    assert jnp.allclose(out, ref, atol=1e-5, rtol=1e-5)

    print("KERNEL_OK")
</pallas_src>

<mosaic_0001>
module attributes {stable_mosaic.version = 11 : i64} {
  func.func @_focal_kernel(%arg0: i32, %arg1: i32, %arg2: memref<1x4x256xf32, #tpu.memory_space<vmem>>, %arg3: memref<1x1x256xi32, #tpu.memory_space<vmem>>, %arg4: memref<1x1x256xf32, #tpu.memory_space<vmem>>) attributes {dimension_semantics = [#tpu.dimension_semantics<parallel>, #tpu.dimension_semantics<parallel>], iteration_bounds = array<i64: 2, 1>, scalar_prefetch = 0 : i64, scratch_operands = 0 : i64, tpu.core_type = #tpu.core_type<tc>, window_params = [{transform_indices = @transform_0, window_bounds = array<i64: 1, 4, 256>}, {transform_indices = @transform_1, window_bounds = array<i64: 1, 1, 256>}, {transform_indices = @transform_2, window_bounds = array<i64: 1, 1, 256>}]} {
    %c0 = arith.constant 0 : index
    %c0_0 = arith.constant 0 : index
    %c0_1 = arith.constant 0 : index
    %0 = vector.load %arg2[%c0, %c0_0, %c0_1] : memref<1x4x256xf32, #tpu.memory_space<vmem>>, vector<1x4x256xf32>
    %1 = vector.shape_cast %0 : vector<1x4x256xf32> to vector<4x256xf32>
    %c0_2 = arith.constant 0 : index
    %c0_3 = arith.constant 0 : index
    %c0_4 = arith.constant 0 : index
    %2 = vector.load %arg3[%c0_2, %c0_3, %c0_4] : memref<1x1x256xi32, #tpu.memory_space<vmem>>, vector<1x1x256xi32>
    %3 = vector.shape_cast %2 : vector<1x1x256xi32> to vector<1x256xi32>
    %cst = arith.constant dense<0xFF800000> : vector<256xf32>
    %4 = vector.multi_reduction <maximumf>, %1, %cst [0] : vector<4x256xf32> to vector<256xf32>
    %5 = vector.shape_cast %4 : vector<256xf32> to vector<1x256xf32>
    %6 = vector.broadcast %5 : vector<1x256xf32> to vector<4x256xf32>
    %7 = arith.subf %1, %6 : vector<4x256xf32>
    %8 = math.exp %7 : vector<4x256xf32>
    %cst_5 = arith.constant dense<0.000000e+00> : vector<256xf32>
    %9 = vector.multi_reduction <add>, %8, %cst_5 [0] : vector<4x256xf32> to vector<256xf32>
    %10 = vector.shape_cast %9 : vector<256xf32> to vector<1x256xf32>
    %11 = tpu.iota {dimensions = array<i32: 0>} : vector<4x256xi32>
    %12 = vector.broadcast %3 : vector<1x256xi32> to vector<4x256xi32>
    %13 = arith.cmpi eq, %11, %12 : vector<4x256xi32>
    %cst_6 = arith.constant 0.000000e+00 : f32
    %14 = vector.broadcast %cst_6 : f32 to vector<4x256xf32>
    %15 = arith.select %13, %8, %14 : vector<4x256xi1>, vector<4x256xf32>
    %cst_7 = arith.constant dense<0.000000e+00> : vector<256xf32>
    %16 = vector.multi_reduction <add>, %15, %cst_7 [0] : vector<4x256xf32> to vector<256xf32>
    %17 = vector.shape_cast %16 : vector<256xf32> to vector<1x256xf32>
    %18 = arith.divf %17, %10 : vector<1x256xf32>
    %cst_8 = arith.constant 9.99999997E-7 : f32
    %19 = vector.broadcast %cst_8 : f32 to vector<1x256xf32>
    %20 = arith.addf %18, %19 : vector<1x256xf32>
    %cst_9 = arith.constant 1.000000e+00 : f32
    %21 = vector.broadcast %cst_9 : f32 to vector<1x256xf32>
    %22 = arith.subf %21, %20 : vector<1x256xf32>
    %cst_10 = arith.constant 1.000000e+00 : f32
    %23 = vector.broadcast %cst_10 : f32 to vector<1x256xf32>
    %24 = arith.mulf %23, %22 : vector<1x256xf32>
    %25 = arith.mulf %24, %22 : vector<1x256xf32>
    %cst_11 = arith.constant -5.000000e-01 : f32
    %26 = vector.broadcast %cst_11 : f32 to vector<1x256xf32>
    %27 = arith.mulf %26, %25 : vector<1x256xf32>
    %28 = math.log %20 : vector<1x256xf32>
    %29 = arith.mulf %27, %28 : vector<1x256xf32>
    %c0_12 = arith.constant 0 : index
    %c0_13 = arith.constant 0 : index
    %c0_14 = arith.constant 0 : index
    %30 = vector.load %arg4[%c0_12, %c0_13, %c0_14] : memref<1x1x256xf32, #tpu.memory_space<vmem>>, vector<1x1x256xf32>
    %31 = vector.shape_cast %30 : vector<1x1x256xf32> to vector<1x256xf32>
    %32 = vector.shape_cast %29 : vector<1x256xf32> to vector<1x1x256xf32>
    tpu.vector_store %arg4[%c0_12, %c0_13, %c0_14], %32 {strides = array<i32>} : memref<1x1x256xf32, #tpu.memory_space<vmem>>, vector<1x1x256xf32>,
    return
  }
  func.func @transform_0(%arg0: i32, %arg1: i32) -> (i32, i32, i32) {
    %c0_i32 = arith.constant 0 : i32
    %c0_i32_0 = arith.constant 0 : i32
    return %arg0, %c0_i32, %arg1 : i32, i32, i32
  }
  func.func @transform_1(%arg0: i32, %arg1: i32) -> (i32, i32, i32) {
    %c0_i32 = arith.constant 0 : i32
    %c0_i32_0 = arith.constant 0 : i32
    return %arg0, %c0_i32, %arg1 : i32, i32, i32
  }
  func.func @transform_2(%arg0: i32, %arg1: i32) -> (i32, i32, i32) {
    %c0_i32 = arith.constant 0 : i32
    %c0_i32_0 = arith.constant 0 : i32
    return %arg0, %c0_i32, %arg1 : i32, i32, i32
  }
}

</mosaic_0001>

<llo_original>
// kernel: tpu_custom_call.1
$region0: #{tpu_custom_call.1}
  #allocation0 [shape = 'u32[]', space=smem, size = 0x4, offset = 0x4, fixed_abs, tag = 'smem constant byte address 0x4 - core index']
  #allocation1 [shape = 'u32[72,128]{1,0:T(1,128)}', space=vmem, size = 0x9000, scoped, tag = 'internal scratch']
  %s0 = inlined_call_operand.hbm [shape: f32[2,4,256], index: 0, kind: input, shape index: {}]
  %s1 = inlined_call_operand.hbm [shape: s32[2,1,256], index: 1, kind: input, shape index: {}]
  %s2 = inlined_call_operand.hbm [shape: f32[2,1,256], index: 2, kind: output, shape index: {}]
  %s3 = sld [smem:[#allocation0]]
  $region49: #{tpu_custom_call.1} parent=0
    _
  %s5 = ssub.s32 1, %s3
  %s6 = scalar_select 0, %s5, %s3
  $region1: #{tpu_custom_call.1} parent=0
    #allocation2 [shape = 'u8[8192]{0}', space=vmem, size = 0x2000, scoped, tag = 'input window, operand 0']
    #allocation3 [shape = 's32[2]{0}', space=sflag, size = 0x8, scoped, tag = 'scoped memory for tpu_custom_call.1']
    #allocation4 [shape = 's32[2]{0}', space=sflag, size = 0x8, scoped, tag = 'scoped memory for tpu_custom_call.1']
    #allocation5 [shape = 'u8[2048]{0}', space=vmem, size = 0x800, scoped, tag = 'input window, operand 1']
    #allocation6 [shape = 's32[2]{0}', space=sflag, size = 0x8, scoped, tag = 'scoped memory for tpu_custom_call.1']
    #allocation7 [shape = 'u8[2048]{0}', space=vmem, size = 0x800, scoped, tag = 'output window, operand 0']
    %7 = vsyncpa [#allocation3], 0
    %s8 = scalar_lea.sflag [#allocation3], 1
    %9 = vsyncpa %s8, 0
    %10 = vsyncpa [#allocation6], 0
    %s11 = scalar_lea.sflag [#allocation6], 1
    %12 = vsyncpa %s11, 0
    %13 = vsyncpa [#allocation4], 0
    %s14 = scalar_lea.sflag [#allocation4], 1
    %15 = vsyncpa %s14, 0
    loop: start=0, step=1, limit=4
    $region2: #{tpu_custom_call.1} parent=1 // loop_pre_header
      _
    $region3: #{tpu_custom_call.1} parent=1 // loop_header
      %s17 = sphi 0, %s21
      %p18 = scmp.ge.s32.totalorder %s17, 4
      %s24 = sphi 0, %s36
      %s25 = sphi 0, %s32
      %s26 = sphi 0, %s24
      %s27 = sphi 0, %s25
      %s28 = sphi 0, %s26
      %s29 = sphi 0, %s27
      %s41 = sphi 0, %s43
      %s44 = sphi 0, %s41
      %s45 = sphi 0, %s44
      %s61 = sphi 0, %s45
      %s69 = sphi 0, %s71
      %s72 = sphi 0, %s69
      %s73 = sphi 0, %s72
      %s89 = sphi 0, %s73
      %s97 = sphi 0, %s99
      %s100 = sphi 0, %s97
      %s101 = sphi 0, %s100
      %s117 = sphi 0, %s101
    $region4: #{tpu_custom_call.1} parent=1 // loop_header_branch
      %20 = sbr.rel (%p18) target = $region8
    $region5: #{tpu_custom_call.1} parent=1 // loop_body
      %s22 = ssub.s32 %s17, 1
      %s23 = ssub.s32 %s17, 2
      %s30 = sadd.s32 1, %s25
      %p31 = scmp.ge.s32.totalorder %s30, 1
      %s32 = scalar_select %p31, 0, %s30
      %s33 = sadd.s32 1, %s24
      %s34 = scalar_select %p31, %s33, %s24
      %p35 = scmp.ge.s32.totalorder %s34, 2
      %s36 = scalar_select %p35, 0, %s34
      %s37 = ssub.s32 %s24, %s36
      %s38 = ssub.s32 %s25, %s32
      %s39 = sor.u32 %s37, %s38
      %p40 = scmp.eq.s32.totalorder %s39, 0
      %s42 = sadd.s32 %s41, 1
      %s43 = scalar_select %p40, %s41, %s42
      %p46 = pneg %p40
      %p47 = scmp.eq.s32.totalorder %s17, 1
      %p48 = por %p46, %p47
      %p49 = scmp.ne.s32.totalorder %s41, %s44
      %p50 = scmp.eq.s32.totalorder %s17, 0
      %p51 = por %p49, %p50
      %p52 = scmp.ne.s32.totalorder %s41, %s44
      %p53 = scmp.eq.s32.totalorder %s22, 1
      %p54 = por %p52, %p53
      %p55 = scmp.ne.s32.totalorder %s44, %s45
      %p56 = scmp.eq.s32.totalorder %s22, 0
      %p57 = por %p55, %p56
      %p58 = scmp.ne.s32.totalorder %s44, %s45
      %p59 = scmp.eq.s32.totalorder %s23, 1
      %p60 = por %p58, %p59
      %p62 = scmp.ne.s32.totalorder %s45, %s61
      %p63 = scmp.eq.s32.totalorder %s23, 0
      %p64 = por %p62, %p63
      %s65 = ssub.s32 %s24, %s36
      %s66 = ssub.s32 %s25, %s32
      %s67 = sor.u32 %s65, %s66
      %p68 = scmp.eq.s32.totalorder %s67, 0
      %s70 = sadd.s32 %s69, 1
      %s71 = scalar_select %p68, %s69, %s70
      %p74 = pneg %p68
      %p75 = scmp.eq.s32.totalorder %s17, 1
      %p76 = por %p74, %p75
      %p77 = scmp.ne.s32.totalorder %s69, %s72
      %p78 = scmp.eq.s32.totalorder %s17, 0
      %p79 = por %p77, %p78
      %p80 = scmp.ne.s32.totalorder %s69, %s72
      %p81 = scmp.eq.s32.totalorder %s22, 1
      %p82 = por %p80, %p81
      %p83 = scmp.ne.s32.totalorder %s72, %s73
      %p84 = scmp.eq.s32.totalorder %s22, 0
      %p85 = por %p83, %p84
      %p86 = scmp.ne.s32.totalorder %s72, %s73
      %p87 = scmp.eq.s32.totalorder %s23, 1
      %p88 = por %p86, %p87
      %p90 = scmp.ne.s32.totalorder %s73, %s89
      %p91 = scmp.eq.s32.totalorder %s23, 0
      %p92 = por %p90, %p91
      %s93 = ssub.s32 %s24, %s36
      %s94 = ssub.s32 %s25, %s32
      %s95 = sor.u32 %s93, %s94
      %p96 = scmp.eq.s32.totalorder %s95, 0
      %s98 = sadd.s32 %s97, 1
      %s99 = scalar_select %p96, %s97, %s98
      %p102 = pneg %p96
      %p103 = scmp.eq.s32.totalorder %s17, 1
      %p104 = por %p102, %p103
      %p105 = scmp.ne.s32.totalorder %s97, %s100
      %p106 = scmp.eq.s32.totalorder %s17, 0
      %p107 = por %p105, %p106
      %p108 = scmp.ne.s32.totalorder %s97, %s100
      %p109 = scmp.eq.s32.totalorder %s22, 1
      %p110 = por %p108, %p109
      %p111 = scmp.ne.s32.totalorder %s100, %s101
      %p112 = scmp.eq.s32.totalorder %s22, 0
      %p113 = por %p111, %p112
      %p114 = scmp.ne.s32.totalorder %s100, %s101
      %p115 = scmp.eq.s32.totalorder %s23, 1
      %p116 = por %p114, %p115
      %p118 = scmp.ne.s32.totalorder %s101, %s117
      %p119 = scmp.eq.s32.totalorder %s23, 0
      %p120 = por %p118, %p119
      %p121 = scmp.le.s32.totalorder 1, %s17
      %p122 = scmp.lt.s32.totalorder %s17, 3
      %p123 = pnand %p121, %p122
      %p124 = pneg %p123
      // Predicated region
      $region9: #{tpu_custom_call.1} parent=5 // pred_check
        _
      $region10: #{tpu_custom_call.1} parent=5 // pred_check_branch
        %126 = sbr.rel (%p123) target = $region12
      $region11: #{tpu_custom_call.1} parent=5 // pred_region
        %s127 = ssub.s32 %s17, 1
      $region12: #{tpu_custom_call.1} parent=5 // pred_fallthru
        _
      %p128 = scmp.lt.s32.totalorder %s17, 2
      // Predicated region
      $region13: #{tpu_custom_call.1} parent=5 // pred_check
        %p129 = pneg %p128
      $region14: #{tpu_custom_call.1} parent=5 // pred_check_branch
        %131 = sbr.rel (%p129) target = $region16
      $region15: #{tpu_custom_call.1} parent=5 // pred_region
        // Predicated region
        $region17: #{tpu_custom_call.1} parent=15 // pred_check
          %p132 = pneg %p51
        $region18: #{tpu_custom_call.1} parent=15 // pred_check_branch
          %134 = sbr.rel (%p132) target = $region20
        $region19: #{tpu_custom_call.1} parent=15 // pred_region
          %s135 = sand.u32 %s41, 1
          %s136 = scalar_lea.sflag [#allocation3], %s135
          %s137 = sand.u32 %s41, 1
          %s138 = smul.addr %s137, 8
          %s139 = scalar_lea.vmem [#allocation2], %s138
          %s140 = smul.u32 2, %s25
          %142 = vsyncadd %s136, 0
          %s143 = smul.addr %s24, 2
          %s144 = sadd.s32 %s140, %s143
          %s145 = smul.addr %s144, 4
          %s146 = scalar_lea.hbm %s0, %s145
          %s148 = sshll.u32 %s146, 4
          %s149 = int_to_ptr.hbm [resolvable:$true] %s148
          %s150 = sshll.u32 %s139, 4
          %s151 = int_to_ptr.vmem [resolvable:$true] %s150
          %153 = dma.hbm_to_vmem [thread:$0]  %s149, 128, %s151, %s136
        $region20: #{tpu_custom_call.1} parent=15 // pred_fallthru
          _
        // Predicated region
        $region21: #{tpu_custom_call.1} parent=15 // pred_check
          %p154 = pneg %p79
        $region22: #{tpu_custom_call.1} parent=15 // pred_check_branch
          %156 = sbr.rel (%p154) target = $region24
        $region23: #{tpu_custom_call.1} parent=15 // pred_region
          %s157 = sand.u32 %s69, 1
          %s158 = scalar_lea.sflag [#allocation6], %s157
          %s159 = sand.u32 %s69, 1
          %s160 = smul.addr %s159, 2
          %s161 = scalar_lea.vmem [#allocation5], %s160
          %s162 = smul.u32 2, %s25
          %164 = vsyncadd %s158, 0
          %s165 = smul.addr %s24, 2
          %s166 = sadd.s32 %s162, %s165
          %s167 = scalar_lea.hbm %s1, %s166
          %s169 = sshll.u32 %s167, 4
          %s170 = int_to_ptr.hbm [resolvable:$true] %s169
          %s171 = sshll.u32 %s161, 4
          %s172 = int_to_ptr.vmem [resolvable:$true] %s171
          %174 = dma.hbm_to_vmem [thread:$0]  %s170, 32, %s172, %s158
        $region24: #{tpu_custom_call.1} parent=15 // pred_fallthru
          _
      $region16: #{tpu_custom_call.1} parent=5 // pred_fallthru
        _
      %p175 = scmp.le.s32.totalorder 1, %s17
      %p176 = scmp.lt.s32.totalorder %s17, 3
      %p177 = pnand %p175, %p176
      %p178 = pneg %p177
      // Predicated region
      $region25: #{tpu_custom_call.1} parent=5 // pred_check
        _
      $region26: #{tpu_custom_call.1} parent=5 // pred_check_branch
        %180 = sbr.rel (%p177) target = $region28
      $region27: #{tpu_custom_call.1} parent=5 // pred_region
        %s181 = ssub.s32 %s17, 1
        %s182 = sand.u32 %s44, 1
        %s183 = scalar_lea.sflag [#allocation3], %s182
        %s184 = sand.u32 %s44, 1
        %s185 = smul.addr %s184, 8
        %s186 = scalar_lea.vmem [#allocation2], %s185
        // Predicated region
        $region29: #{tpu_custom_call.1} parent=27 // pred_check
          %p187 = pneg %p57
        $region30: #{tpu_custom_call.1} parent=27 // pred_check_branch
          %189 = sbr.rel (%p187) target = $region32
        $region31: #{tpu_custom_call.1} parent=27 // pred_region
          %191 = dma.done %s183, 128
        $region32: #{tpu_custom_call.1} parent=27 // pred_fallthru
          _
        %s192 = sand.u32 %s72, 1
        %s193 = scalar_lea.sflag [#allocation6], %s192
        %s194 = sand.u32 %s72, 1
        %s195 = smul.addr %s194, 2
        %s196 = scalar_lea.vmem [#allocation5], %s195
        // Predicated region
        $region33: #{tpu_custom_call.1} parent=27 // pred_check
          %p197 = pneg %p85
        $region34: #{tpu_custom_call.1} parent=27 // pred_check_branch
          %199 = sbr.rel (%p197) target = $region36
        $region35: #{tpu_custom_call.1} parent=27 // pred_region
          %201 = dma.done %s193, 32
        $region36: #{tpu_custom_call.1} parent=27 // pred_fallthru
          _
        %s202 = sand.u32 %s44, 1
        %s203 = scalar_lea.sflag [#allocation3], %s202
        %s204 = sand.u32 %s44, 1
        %s205 = smul.addr %s204, 8
        %s206 = scalar_lea.vmem [#allocation2], %s205
        %p207 = pneg %p57
        %p208 = pneg %p54
        %s209 = sand.u32 %s72, 1
        %s210 = scalar_lea.sflag [#allocation6], %s209
        %s211 = sand.u32 %s72, 1
        %s212 = smul.addr %s211, 2
        %s213 = scalar_lea.vmem [#allocation5], %s212
        %p214 = pneg %p85
        %p215 = pneg %p82
        %p216 = pneg %p113
        %p217 = pneg %p110
        %s218 = sand.u32 %s100, 1
        %s219 = scalar_lea.sflag [#allocation4], %s218
        %s220 = sand.u32 %s100, 1
        %s221 = smul.addr %s220, 2
        %s222 = scalar_lea.vmem [#allocation7], %s221
        %s223 = smul.u32 2, %s27
        %s224 = smul.u32 2, %s27
        %s225 = smul.u32 2, %s27
        %v226 = vld [vmem:[%s186] sm:$0xff]
        %v227 = vld [vmem:[%s196] sm:$0x3]
        %229 = vst [vmem:[#allocation1] ss:$2 sm:$0xff] %v226
        %v230 = vld.sshfl [vmem:[#allocation1] sm:$0xff pattern:$0x75316420]
        %v231 = vld.sshfl [vmem:[#allocation1 + $0x8] sm:$0xff pattern:$0x75316420]
        %vm234 = vcmask 1043456
        %v235 = vsel %vm234, %v230, -inf
        %v236 = vrot.slane %v235, 4
        %v237 = vmax.f32 %v235, %v236
        %v238 = vrot.slane %v237, 2
        %v239 = vmax.f32 %v237, %v238
        %v240 = vrot.slane %v239, 1
        %v241 = vmax.f32 %v239, %v240
        %v242 = vsel %vm234, %v231, -inf
        %v243 = vrot.slane %v242, 4
        %v244 = vmax.f32 %v242, %v243
        %v245 = vrot.slane %v244, 2
        %v246 = vmax.f32 %v244, %v245
        %v247 = vrot.slane %v246, 1
        %v248 = vmax.f32 %v246, %v247
        %v251 = vrot.slane %v248, 4
        %v252 = vsel %vm234, %v241, %v251
        %v254 = vsub.f32 %v226, %v252
        %v255 = vmul.f32 %v254, 1.442695
        %v256 = vpow.pop %v255
        %258 = vst [vmem:[#allocation1] ss:$2 sm:$0xff] %v256
        %v259 = vld.sshfl [vmem:[#allocation1] sm:$0xff pattern:$0x75316420]
        %v260 = vld.sshfl [vmem:[#allocation1 + $0x8] sm:$0xff pattern:$0x75316420]
        %v263 = vsel %vm234, %v259, 0.0
        %v264 = vrot.slane %v263, 4
        %v265 = vadd.f32 %v263, %v264
        %v266 = vrot.slane %v265, 2
        %v267 = vadd.f32 %v265, %v266
        %v268 = vrot.slane %v267, 1
        %v269 = vadd.f32 %v267, %v268
        %v270 = vsel %vm234, %v260, 0.0
        %v271 = vrot.slane %v270, 4
        %v272 = vadd.f32 %v270, %v271
        %v273 = vrot.slane %v272, 2
        %v274 = vadd.f32 %v272, %v273
        %v275 = vrot.slane %v274, 1
        %v276 = vadd.f32 %v274, %v275
        %v277 = vlaneseq
        %v278 = vshrl.u32 %v277, 7
        %v279 = vperm.slane %v227, 0
        %v280 = vperm.slane %v227, 1
        %vm281 = vcmp.eq.s32.totalorder %v278, %v279
        %vm282 = vcmp.eq.s32.totalorder %v278, %v280
        %283 = vst [vmem:[#allocation1] ss:$2 sm:$0xff] %v256
        %v284 = vld.sshfl [vmem:[#allocation1] sm:$0xff pattern:$0x75316420]
        %v285 = vld.sshfl [vmem:[#allocation1 + $0x8] sm:$0xff pattern:$0x75316420]
        %v288 = vsel %vm281, %v284, 0.0
        %v289 = vsel %vm282, %v285, 0.0
        %v290 = vsel %vm234, %v288, 0.0
        %v291 = vrot.slane %v290, 4
        %v292 = vadd.f32 %v290, %v291
        %v293 = vrot.slane %v292, 2
        %v294 = vadd.f32 %v292, %v293
        %v295 = vrot.slane %v294, 1
        %v296 = vadd.f32 %v294, %v295
        %v297 = vsel %vm234, %v289, 0.0
        %v298 = vrot.slane %v297, 4
        %v299 = vadd.f32 %v297, %v298
        %v300 = vrot.slane %v299, 2
        %v301 = vadd.f32 %v299, %v300
        %v302 = vrot.slane %v301, 1
        %v303 = vadd.f32 %v301, %v302
        %v304 = vrcp.pop %v269
        %v305 = vmul.f32 %v269, %v304
        %v306 = vsub.f32 1.0, %v305
        %v307 = vmul.f32 %v304, %v306
        %v308 = vadd.f32 %v304, %v307
        %vm309 = vweird.f32 %v269
        %vm310 = vweird.f32 %v304
        %vm311 = vmor %vm309, %vm310
        %v312 = vsel %vm311, %v304, %v308
        %v313 = vand.u32 2147483647, %v269
        %vm314 = vcmp.eq.f32.partialorder %v313, 8.507059e+37
        %v315 = vand.u32 %v269, 2147483648
        %v316 = vor.u32 1.1754944e-38, %v315
        %v317 = vsel %vm314, %v316, %v312
        %v318 = vmul.f32 %v296, %v317
        %v319 = vrcp.pop %v276
        %v320 = vmul.f32 %v276, %v319
        %v321 = vsub.f32 1.0, %v320
        %v322 = vmul.f32 %v319, %v321
        %v323 = vadd.f32 %v319, %v322
        %vm324 = vweird.f32 %v276
        %vm325 = vweird.f32 %v319
        %vm326 = vmor %vm324, %vm325
        %v327 = vsel %vm326, %v319, %v323
        %v328 = vand.u32 2147483647, %v276
        %vm329 = vcmp.eq.f32.partialorder %v328, 8.507059e+37
        %v330 = vand.u32 %v276, 2147483648
        %v331 = vor.u32 1.1754944e-38, %v330
        %v332 = vsel %vm329, %v331, %v327
        %v333 = vmul.f32 %v303, %v332
        %v334 = vadd.f32 %v318, 1e-06
        %v335 = vadd.f32 %v333, 1e-06
        %v336 = vsub.f32 1.0, %v334
        %v337 = vsub.f32 1.0, %v335
        %v338 = vmul.f32 %v336, %v336
        %v339 = vmul.f32 %v337, %v337
        %v340 = vmul.f32 %v338, -0.5
        %v341 = vmul.f32 %v339, -0.5
        %v342 = vlog2.pop %v334
        %v343 = vmul.f32 %v342, 0.6931472
        %v344 = vlog2.pop %v335
        %v345 = vmul.f32 %v344, 0.6931472
        %v346 = vmul.f32 %v340, %v343
        %v347 = vmul.f32 %v341, %v345
        %v350 = vrot.slane %v347, 7
        %vm351 = vcmask 1040384
        %v352 = vsel %vm351, %v346, %v350
        %v354 = vlaneseq
        %vm355 = vcmp.ge.s32.totalorder %v354, 0
        %vm356 = vcmp.lt.s32.totalorder %v354, 256
        %vm357 = vmand %vm355, %vm356
        %358 = vst.msk [vmem:[%s222] sm:$0x3] %vm357, %v352
        %s359 = sand.u32 %s100, 1
        %s360 = scalar_lea.sflag [#allocation4], %s359
        %s361 = sand.u32 %s100, 1
        %s362 = smul.addr %s361, 2
        %s363 = scalar_lea.vmem [#allocation7], %s362
        // Predicated region
        $region37: #{tpu_custom_call.1} parent=27 // pred_check
          %p364 = pneg %p110
        $region38: #{tpu_custom_call.1} parent=27 // pred_check_branch
          %366 = sbr.rel (%p364) target = $region40
        $region39: #{tpu_custom_call.1} parent=27 // pred_region
          %s367 = smul.u32 2, %s27
          %369 = vsyncadd %s360, 0
          %s370 = smul.addr %s26, 2
          %s371 = sadd.s32 %s367, %s370
          %s372 = scalar_lea.hbm %s2, %s371
          %s374 = sshll.u32 %s363, 4
          %s375 = int_to_ptr.vmem [resolvable:$true] %s374
          %s376 = sshll.u32 %s372, 4
          %s377 = int_to_ptr.hbm [resolvable:$true] %s376
          %379 = dma.vmem_to_hbm [thread:$0]  %s375, 32, %s377, %s360
        $region40: #{tpu_custom_call.1} parent=27 // pred_fallthru
          _
      $region28: #{tpu_custom_call.1} parent=5 // pred_fallthru
        _
      %p380 = scmp.le.s32.totalorder 2, %s17
      // Predicated region
      $region41: #{tpu_custom_call.1} parent=5 // pred_check
        %p381 = pneg %p380
      $region42: #{tpu_custom_call.1} parent=5 // pred_check_branch
        %383 = sbr.rel (%p381) target = $region44
      $region43: #{tpu_custom_call.1} parent=5 // pred_region
        %s384 = ssub.s32 %s17, 2
        // Predicated region
        $region45: #{tpu_custom_call.1} parent=43 // pred_check
          %p385 = pneg %p116
        $region46: #{tpu_custom_call.1} parent=43 // pred_check_branch
          %387 = sbr.rel (%p385) target = $region48
        $region47: #{tpu_custom_call.1} parent=43 // pred_region
          %s388 = sand.u32 %s101, 1
          %s389 = scalar_lea.sflag [#allocation4], %s388
          %s390 = sand.u32 %s101, 1
          %s391 = smul.addr %s390, 2
          %s392 = scalar_lea.vmem [#allocation7], %s391
          %394 = dma.done %s389, 32
        $region48: #{tpu_custom_call.1} parent=43 // pred_fallthru
          _
      $region44: #{tpu_custom_call.1} parent=5 // pred_fallthru
        _
    $region6: #{tpu_custom_call.1} parent=1 // loop_footer
      %s21 = sadd.s32 1, %s17
    $region7: #{tpu_custom_call.1} parent=1 // loop_footer_branch
      %16 = sbr.rel target = $region3
    $region8: #{tpu_custom_call.1} parent=1 // loop_exit
      _
    %395 = vsyncpa [#allocation3], 1
    %s396 = scalar_lea.sflag [#allocation3], 1
    %397 = vsyncpa %s396, 1
    %398 = vsyncpa [#allocation6], 1
    %s399 = scalar_lea.sflag [#allocation6], 1
    %400 = vsyncpa %s399, 1
    %401 = vsyncpa [#allocation4], 1
    %s402 = scalar_lea.sflag [#allocation4], 1
    %403 = vsyncpa %s402, 1

</llo_original>
